<compile_context>
chip_gen: v7x
topology: tpu7x:2x2x1
jax: 0.10.0
libtpu: 0.0.40
codegen_flags: <defaults>
</compile_context>

<pallas_src>
import jax
import jax.numpy as jnp
import numpy as np
from jax.experimental import pallas as pl
from jax.experimental.pallas import tpu as pltpu


def _round_up(x, m):
    return (x + m - 1) // m * m


# ---------------- model configuration (synthetic, deterministic) ----------------
VOCAB_SIZES = [5, 1, 7, 1, 11]   # mixed categorical / numeric (vocab_size == 1) fields
EMB = 8                          # embedding_size
HID = 32                         # hidden_dims
HIDDEN_NUMS = 3                  # dnn_0 .. dnn_2
NUM_OUT = 1                      # num_outputs
BATCH = 8

NF = len(VOCAB_SIZES)                               # raw fields (5)
DEEP_IN = sum(VOCAB_SIZES)                          # deep_input_dim = 25
N_NUM = sum(1 for v in VOCAB_SIZES if v == 1)       # numeric fields (come first) = 2
NCOL = HID + 2 * EMB + 1                            # fused input-weight columns = 49
D_PAD = _round_up(DEEP_IN + N_NUM, 8)               # 25 real + 2 helper (x^2-x) + pad = 32


# ---------------------------------- kernel ----------------------------------
def deepfm_kernel(x_ref, meta_ref, w_in_ref, w_mid_ref, b_ref, red_ref, out_ref):
    x = x_ref[...]                                   # (NF, TB)  raw fields, batch on lanes
    meta = meta_ref[...]                             # (D_PAD, NF+4) deep-row table

    # In-kernel deep-input construction (feature-major): g[d, :] = x[field(d), :].
    g = jnp.dot(meta[:, :NF], x, preferred_element_type=jnp.float32)        # (D_PAD, TB)
    onehot = (g == meta[:, NF:NF + 1]).astype(jnp.float32)
    # Per-row linear combo selects: raw numeric x, one-hot(g==class), or x^2 - x.
    xd_t = (meta[:, NF + 1:NF + 2] * (g * g)
            + meta[:, NF + 2:NF + 3] * g
            + meta[:, NF + 3:NF + 4] * onehot)       # (D_PAD, TB)

    # One fused matmul: first DNN layer / FM sum / FM square-sum / linear(+correction).
    big = jnp.dot(w_in_ref[...], xd_t, preferred_element_type=jnp.float32)  # (NCOL, TB)
    h0 = big[0:HID, :]                               # w0 @ xd_t
    s = big[HID:HID + EMB, :]                        # sum_f e_f
    sqb = big[HID + EMB:HID + 2 * EMB, :]            # xd @ wfm^2 (numeric cols un-squared)
    linc = big[HID + 2 * EMB:HID + 2 * EMB + 1, :]   # linear part + numeric FM correction

    # DNN stack (nn.Dropout == identity in eval mode).
    b = b_ref[...]                                   # (HID, HIDDEN_NUMS)
    h = jnp.tanh(h0 + b[:, 0:1])
    for l in range(HIDDEN_NUMS - 1):
        h = jnp.tanh(jnp.dot(w_mid_ref[l], h, preferred_element_type=jnp.float32)
                     + b[:, l + 1:l + 2])

    # Fused epilogue: 0.5*sum_e(s^2 - sq) + wout @ h   as one (1, EMB+HID) dot.
    z = jnp.concatenate([s * s - sqb, h], axis=0)    # (EMB+HID, TB), 8-aligned pieces
    out_ref[...] = linc + jnp.dot(red_ref[...], z, preferred_element_type=jnp.float32)


# ------------------------------ parameter setup ------------------------------
def make_params(key):
    gain = 5.0 / 3.0  # nn.init.calculate_gain('tanh')
    ks = iter(jax.random.split(key, 64))

    def xavier(k, shape):  # torch weight convention (out, in)
        fan_out, fan_in = shape[0], shape[1]
        lim = gain * (6.0 / (fan_in + fan_out)) ** 0.5
        return jax.random.uniform(k, shape, jnp.float32, -lim, lim)

    params = {"lin_emb": [], "fm_emb": []}
    for v in VOCAB_SIZES:
        if v > 1:
            params["lin_emb"].append(xavier(next(ks), (v, 1)))        # nn.Embedding(v, 1)
            params["fm_emb"].append(xavier(next(ks), (v, EMB)))       # nn.Embedding(v, EMB)
        else:
            params["lin_emb"].append(xavier(next(ks), (1, 1)))        # nn.Linear(1, 1, bias=False)
            params["fm_emb"].append(xavier(next(ks), (EMB, 1)))       # nn.Linear(1, EMB, bias=False)

    params["w0"] = xavier(next(ks), (HID, DEEP_IN))
    params["b0"] = jax.random.uniform(next(ks), (HID,), jnp.float32, -1, 1) / (DEEP_IN ** 0.5)
    for i in range(1, HIDDEN_NUMS):
        params[f"w{i}"] = xavier(next(ks), (HID, HID))
        params[f"b{i}"] = jax.random.uniform(next(ks), (HID,), jnp.float32, -1, 1) / (HID ** 0.5)
    params["wout"] = xavier(next(ks), (NUM_OUT, HID))                 # nn.Linear(HID, 1, bias=False)
    return params


def pack_weights(params):
    """One-time packing of weights + the deep-input row table into 5 small,
    VMEM-resident kernel inputs (hoisted out of the per-call path).

    Deep-input row order (single source of truth; meta rows == w_in_t columns):
      [0 .. N_NUM)               : numeric fields, raw value x            (field order)
      [N_NUM .. DEEP_IN)         : categorical fields, one-hot blocks     (field order)
      [DEEP_IN .. DEEP_IN+N_NUM) : helper rows carrying x^2 - x  (FM square-sum fix)
      [DEEP_IN+N_NUM .. D_PAD)   : zero padding
    """
    numeric_fields = [i for i, v in enumerate(VOCAB_SIZES) if v == 1]
    categ_fields = [i for i, v in enumerate(VOCAB_SIZES) if v > 1]

    sel = np.zeros((D_PAD, NF), np.float32)     # g = sel @ x (field gather)
    off = np.zeros((D_PAD, 1), np.float32)      # one-hot class offset
    ca = np.zeros((D_PAD, 1), np.float32)       # coefficient of g*g
    cb = np.zeros((D_PAD, 1), np.float32)       # coefficient of g
    cc = np.zeros((D_PAD, 1), np.float32)       # coefficient of (g == off)

    lin_rows, fm_rows = [], []
    r = 0
    for f in numeric_fields:                    # numeric rows: value = x
        sel[r, f] = 1.0
        cb[r, 0] = 1.0
        lin_rows.append(params["lin_emb"][f].T)              # (1, 1)
        fm_rows.append(params["fm_emb"][f].T)                # (1, EMB)
        r += 1
    for f in categ_fields:                      # categorical rows: value = one-hot
        for cls in range(VOCAB_SIZES[f]):
            sel[r, f] = 1.0
            off[r, 0] = float(cls)
            cc[r, 0] = 1.0
            r += 1
        lin_rows.append(params["lin_emb"][f])                # (v, 1)
        fm_rows.append(params["fm_emb"][f])                  # (v, EMB)
    assert r == DEEP_IN
    for f in numeric_fields:                    # helper rows: value = x^2 - x
        sel[r, f] = 1.0
        ca[r, 0] = 1.0
        cb[r, 0] = -1.0
        r += 1
    meta = jnp.asarray(np.concatenate([sel, off, ca, cb, cc], axis=1))   # (D_PAD, NF+4)

    wlin = jnp.concatenate(lin_rows, axis=0)                 # (DEEP_IN, 1)
    wfm = jnp.concatenate(fm_rows, axis=0)                   # (DEEP_IN, EMB)

    # Fused input weight, columns [w0.T | wfm | wfm^2 | wlin]: 8-aligned segment
    # offsets 0 / HID / HID+EMB / HID+2*EMB along big's sublane axis.
    w_in = jnp.concatenate([params["w0"].T, wfm, wfm * wfm, wlin], axis=1)   # (DEEP_IN, NCOL)
    # Helper rows only touch the linear column: c_j = -0.5 * sum_e wfm[j, e]^2,
    # which times (x^2 - x) is exactly the numeric-column FM square-sum correction.
    c = -0.5 * jnp.sum(wfm[:N_NUM] ** 2, axis=1, keepdims=True)              # (N_NUM, 1)
    helper = jnp.concatenate([jnp.zeros((N_NUM, NCOL - 1), jnp.float32), c], axis=1)
    pad = jnp.zeros((D_PAD - DEEP_IN - N_NUM, NCOL), jnp.float32)
    w_in_t = jnp.concatenate([w_in, helper, pad], axis=0).T                  # (NCOL, D_PAD)

    w_mid = jnp.stack([params[f"w{i}"] for i in range(1, HIDDEN_NUMS)])      # (L-1, HID, HID)
    b_cols = jnp.stack([params[f"b{i}"] for i in range(HIDDEN_NUMS)], axis=1)  # (HID, L)
    # Fused epilogue row: [0.5 * ones(EMB) | wout].
    w_red = jnp.concatenate([jnp.full((1, EMB), 0.5, jnp.float32),
                             params["wout"].astype(jnp.float32)], axis=1)    # (1, EMB+HID)
    return meta, w_in_t, w_mid, b_cols, w_red


# ------------------------------ Pallas wrapper ------------------------------
def _pick_tile(b_pad):
    """Largest batch tile (multiple of 128, <= 512) dividing b_pad, preferring
    >= 2 grid steps once b_pad >= 256 so the 'parallel' axis spans both v7x TCs."""
    tb = 128
    for cand in (256, 384, 512):
        if b_pad % cand == 0 and b_pad // cand >= 2:
            tb = cand
    return tb


def deepfm_pallas(X, packed):
    meta, w_in_t, w_mid, b_cols, w_red = packed
    B = X.shape[0]
    B_pad = _round_up(B, 128)
    TB = _pick_tile(B_pad)

    # Raw field slab with batch on the lane axis: 20 B/row of input HBM traffic
    # (the 25-wide one-hot deep input is built in-kernel, never written to HBM).
    xt = X.astype(jnp.float32).T                     # (NF, B)
    if B_pad != B:
        xt = jnp.pad(xt, ((0, 0), (0, B_pad - B)))   # pad -> field value 0 (valid class)

    out = pl.pallas_call(
        deepfm_kernel,
        out_shape=jax.ShapeDtypeStruct((1, B_pad), jnp.float32),
        grid=(B_pad // TB,),
        in_specs=[
            pl.BlockSpec((NF, TB), lambda i: (0, i)),        # per-step batch slab
            pl.BlockSpec(meta.shape, lambda i: (0, 0)),      # resident: deep-row table
            pl.BlockSpec(w_in_t.shape, lambda i: (0, 0)),    # resident: fused input weight
            pl.BlockSpec(w_mid.shape, lambda i: (0, 0, 0)),  # resident: hidden weights
            pl.BlockSpec(b_cols.shape, lambda i: (0, 0)),    # resident: biases
            pl.BlockSpec(w_red.shape, lambda i: (0, 0)),     # resident: epilogue row
        ],
        out_specs=pl.BlockSpec((1, TB), lambda i: (0, i)),   # lane-dense, 4 B/row writeback
        compiler_params=pltpu.CompilerParams(
            dimension_semantics=("parallel",)),
    )(xt, meta, w_in_t, w_mid, b_cols, w_red)
    return out[0, :B]                                        # (B,)


# ------------------------- pure-JAX torch-style reference -------------------------
def reference_forward(X, params):
    lin_list, fm_list, num_list, cat_list = [], [], [], []
    for i, v in enumerate(VOCAB_SIZES):
        if v == 1:
            x_i = X[:, i:i + 1].astype(jnp.float32)
            lin_list.append(x_i @ params["lin_emb"][i].T)              # (B, 1)
            fm_list.append(x_i @ params["fm_emb"][i].T)                # (B, EMB)
            num_list.append(x_i)
        else:
            idx = X[:, i].astype(jnp.int32)
            lin_list.append(params["lin_emb"][i][idx])                 # (B, 1)
            fm_list.append(params["fm_emb"][i][idx])                   # (B, EMB)
            cat_list.append(jax.nn.one_hot(idx, v, dtype=jnp.float32))

    linear_out = jnp.squeeze(jnp.stack(lin_list, axis=1))              # (B, F)
    fm_emb = jnp.stack(fm_list, axis=1)                                # (B, F, E)
    s = jnp.sum(fm_emb, axis=1)
    fm_second = 0.5 * (s ** 2 - jnp.sum(fm_emb * fm_emb, axis=1))

    X_dnn = jnp.concatenate(num_list + cat_list, axis=1)
    h = jnp.tanh(X_dnn @ params["w0"].T + params["b0"])
    for i in range(1, HIDDEN_NUMS):
        h = jnp.tanh(h @ params[f"w{i}"].T + params[f"b{i}"])
    dnn_out = h @ params["wout"].T

    return (jnp.sum(linear_out, axis=1) + jnp.sum(fm_second, axis=1)
            + jnp.sum(dnn_out, axis=1))


if __name__ == "__main__":
    key = jax.random.PRNGKey(0)
    k_param, k_num, k_cat = jax.random.split(key, 3)
    params = make_params(k_param)
    packed = pack_weights(params)   # one-time weight packing (not in the per-call path)

    # Build input X (B, F): numeric columns hold float values, categorical columns hold
    # integer-valued indices (stored as float, matching X[:, i].long() in the reference).
    cols = []
    cat_keys = iter(jax.random.split(k_cat, len(VOCAB_SIZES)))
    num_keys = iter(jax.random.split(k_num, len(VOCAB_SIZES)))
    for v in VOCAB_SIZES:
        if v == 1:
            cols.append(jax.random.normal(next(num_keys), (BATCH, 1), jnp.float32))
        else:
            idx = jax.random.randint(next(cat_keys), (BATCH, 1), 0, v)
            cols.append(idx.astype(jnp.float32))
    X = jnp.concatenate(cols, axis=1)                                  # (BATCH, 5)

    out_kernel = jax.block_until_ready(deepfm_pallas(X, packed))
    out_ref = jax.block_until_ready(reference_forward(X, params))

    assert out_kernel.shape == (BATCH,)
    assert jnp.allclose(out_kernel, out_ref, rtol=1e-4, atol=1e-4), (out_kernel, out_ref)
    print("KERNEL_OK")
</pallas_src>

<mosaic_0001>
module attributes {stable_mosaic.version = 11 : i64} {
  func.func @deepfm_kernel(%arg0: i32, %arg1: memref<5x128xf32, #tpu.memory_space<vmem>>, %arg2: memref<32x9xf32, #tpu.memory_space<vmem>>, %arg3: memref<49x32xf32, #tpu.memory_space<vmem>>, %arg4: memref<2x32x32xf32, #tpu.memory_space<vmem>>, %arg5: memref<32x3xf32, #tpu.memory_space<vmem>>, %arg6: memref<1x40xf32, #tpu.memory_space<vmem>>, %arg7: memref<1x128xf32, #tpu.memory_space<vmem>>) attributes {dimension_semantics = [#tpu.dimension_semantics<parallel>], iteration_bounds = array<i64: 1>, scalar_prefetch = 0 : i64, scratch_operands = 0 : i64, tpu.core_type = #tpu.core_type<tc>, window_params = [{transform_indices = @transform_0, window_bounds = array<i64: 5, 128>}, {pipeline_mode = #tpu.pipeline_mode<synchronous>, transform_indices = @transform_1, window_bounds = array<i64: 32, 9>}, {pipeline_mode = #tpu.pipeline_mode<synchronous>, transform_indices = @transform_2, window_bounds = array<i64: 49, 32>}, {pipeline_mode = #tpu.pipeline_mode<synchronous>, transform_indices = @transform_3, window_bounds = array<i64: 2, 32, 32>}, {pipeline_mode = #tpu.pipeline_mode<synchronous>, transform_indices = @transform_4, window_bounds = array<i64: 32, 3>}, {pipeline_mode = #tpu.pipeline_mode<synchronous>, transform_indices = @transform_5, window_bounds = array<i64: 1, 40>}, {transform_indices = @transform_6, window_bounds = array<i64: 1, 128>}]} {
    %c0 = arith.constant 0 : index
    %c0_0 = arith.constant 0 : index
    %0 = vector.load %arg1[%c0, %c0_0] : memref<5x128xf32, #tpu.memory_space<vmem>>, vector<5x128xf32>
    %c0_1 = arith.constant 0 : index
    %c0_2 = arith.constant 0 : index
    %1 = vector.load %arg2[%c0_1, %c0_2] : memref<32x9xf32, #tpu.memory_space<vmem>>, vector<32x9xf32>
    %2 = vector.extract_strided_slice %1 {offsets = [0, 0], sizes = [32, 5], strides = [1, 1]} : vector<32x9xf32> to vector<32x5xf32>
    %cst = arith.constant dense<0.000000e+00> : vector<32x128xf32>
    %3 = tpu.matmul %2, %0, %cst {dimension_numbers = #tpu.dot_dimension_numbers<[1], [0], [0], [1], [0, 0, 1, 1], [], []>} : vector<32x5xf32>, vector<5x128xf32>, vector<32x128xf32> -> vector<32x128xf32>
    %4 = vector.extract_strided_slice %1 {offsets = [0, 5], sizes = [32, 1], strides = [1, 1]} : vector<32x9xf32> to vector<32x1xf32>
    %5 = vector.broadcast %4 : vector<32x1xf32> to vector<32x128xf32>
    %6 = arith.cmpf oeq, %3, %5 : vector<32x128xf32>
    %7 = arith.extui %6 : vector<32x128xi1> to vector<32x128xi32>
    %8 = arith.sitofp %7 : vector<32x128xi32> to vector<32x128xf32>
    %9 = vector.extract_strided_slice %1 {offsets = [0, 6], sizes = [32, 1], strides = [1, 1]} : vector<32x9xf32> to vector<32x1xf32>
    %10 = arith.mulf %3, %3 : vector<32x128xf32>
    %11 = vector.broadcast %9 : vector<32x1xf32> to vector<32x128xf32>
    %12 = arith.mulf %11, %10 : vector<32x128xf32>
    %13 = vector.extract_strided_slice %1 {offsets = [0, 7], sizes = [32, 1], strides = [1, 1]} : vector<32x9xf32> to vector<32x1xf32>
    %14 = vector.broadcast %13 : vector<32x1xf32> to vector<32x128xf32>
    %15 = arith.mulf %14, %3 : vector<32x128xf32>
    %16 = arith.addf %12, %15 : vector<32x128xf32>
    %17 = vector.extract_strided_slice %1 {offsets = [0, 8], sizes = [32, 1], strides = [1, 1]} : vector<32x9xf32> to vector<32x1xf32>
    %18 = vector.broadcast %17 : vector<32x1xf32> to vector<32x128xf32>
    %19 = arith.mulf %18, %8 : vector<32x128xf32>
    %20 = arith.addf %16, %19 : vector<32x128xf32>
    %c0_3 = arith.constant 0 : index
    %c0_4 = arith.constant 0 : index
    %21 = vector.load %arg3[%c0_3, %c0_4] : memref<49x32xf32, #tpu.memory_space<vmem>>, vector<49x32xf32>
    %cst_5 = arith.constant dense<0.000000e+00> : vector<49x128xf32>
    %22 = tpu.matmul %21, %20, %cst_5 {dimension_numbers = #tpu.dot_dimension_numbers<[1], [0], [0], [1], [0, 0, 1, 1], [], []>} : vector<49x32xf32>, vector<32x128xf32>, vector<49x128xf32> -> vector<49x128xf32>
    %23 = vector.extract_strided_slice %22 {offsets = [0, 0], sizes = [32, 128], strides = [1, 1]} : vector<49x128xf32> to vector<32x128xf32>
    %24 = vector.extract_strided_slice %22 {offsets = [32, 0], sizes = [8, 128], strides = [1, 1]} : vector<49x128xf32> to vector<8x128xf32>
    %25 = vector.extract_strided_slice %22 {offsets = [40, 0], sizes = [8, 128], strides = [1, 1]} : vector<49x128xf32> to vector<8x128xf32>
    %26 = vector.extract_strided_slice %22 {offsets = [48, 0], sizes = [1, 128], strides = [1, 1]} : vector<49x128xf32> to vector<1x128xf32>
    %c0_6 = arith.constant 0 : index
    %c0_7 = arith.constant 0 : index
    %27 = vector.load %arg5[%c0_6, %c0_7] : memref<32x3xf32, #tpu.memory_space<vmem>>, vector<32x3xf32>
    %28 = vector.extract_strided_slice %27 {offsets = [0, 0], sizes = [32, 1], strides = [1, 1]} : vector<32x3xf32> to vector<32x1xf32>
    %29 = vector.broadcast %28 : vector<32x1xf32> to vector<32x128xf32>
    %30 = arith.addf %23, %29 : vector<32x128xf32>
    %31 = math.tanh %30 : vector<32x128xf32>
    %c0_8 = arith.constant 0 : index
    %c0_9 = arith.constant 0 : index
    %c0_10 = arith.constant 0 : index
    %32 = vector.load %arg4[%c0_8, %c0_9, %c0_10] : memref<2x32x32xf32, #tpu.memory_space<vmem>>, vector<1x32x32xf32>
    %33 = vector.shape_cast %32 : vector<1x32x32xf32> to vector<32x32xf32>
    %cst_11 = arith.constant dense<0.000000e+00> : vector<32x128xf32>
    %34 = tpu.matmul %33, %31, %cst_11 {dimension_numbers = #tpu.dot_dimension_numbers<[1], [0], [0], [1], [0, 0, 1, 1], [], []>} : vector<32x32xf32>, vector<32x128xf32>, vector<32x128xf32> -> vector<32x128xf32>
    %35 = vector.extract_strided_slice %27 {offsets = [0, 1], sizes = [32, 1], strides = [1, 1]} : vector<32x3xf32> to vector<32x1xf32>
    %36 = vector.broadcast %35 : vector<32x1xf32> to vector<32x128xf32>
    %37 = arith.addf %34, %36 : vector<32x128xf32>
    %38 = math.tanh %37 : vector<32x128xf32>
    %c1 = arith.constant 1 : index
    %c0_12 = arith.constant 0 : index
    %c0_13 = arith.constant 0 : index
    %39 = vector.load %arg4[%c1, %c0_12, %c0_13] : memref<2x32x32xf32, #tpu.memory_space<vmem>>, vector<1x32x32xf32>
    %40 = vector.shape_cast %39 : vector<1x32x32xf32> to vector<32x32xf32>
    %cst_14 = arith.constant dense<0.000000e+00> : vector<32x128xf32>
    %41 = tpu.matmul %40, %38, %cst_14 {dimension_numbers = #tpu.dot_dimension_numbers<[1], [0], [0], [1], [0, 0, 1, 1], [], []>} : vector<32x32xf32>, vector<32x128xf32>, vector<32x128xf32> -> vector<32x128xf32>
    %42 = vector.extract_strided_slice %27 {offsets = [0, 2], sizes = [32, 1], strides = [1, 1]} : vector<32x3xf32> to vector<32x1xf32>
    %43 = vector.broadcast %42 : vector<32x1xf32> to vector<32x128xf32>
    %44 = arith.addf %41, %43 : vector<32x128xf32>
    %45 = math.tanh %44 : vector<32x128xf32>
    %46 = arith.mulf %24, %24 : vector<8x128xf32>
    %47 = arith.subf %46, %25 : vector<8x128xf32>
    %48 = tpu.concatenate %47, %45 in 0 : vector<8x128xf32>, vector<32x128xf32> -> vector<40x128xf32>
    %c0_15 = arith.constant 0 : index
    %c0_16 = arith.constant 0 : index
    %49 = vector.load %arg6[%c0_15, %c0_16] : memref<1x40xf32, #tpu.memory_space<vmem>>, vector<1x40xf32>
    %cst_17 = arith.constant dense<0.000000e+00> : vector<1x128xf32>
    %50 = tpu.matmul %49, %48, %cst_17 {dimension_numbers = #tpu.dot_dimension_numbers<[1], [0], [0], [1], [0, 0, 1, 1], [], []>} : vector<1x40xf32>, vector<40x128xf32>, vector<1x128xf32> -> vector<1x128xf32>
    %51 = arith.addf %26, %50 : vector<1x128xf32>
    %c0_18 = arith.constant 0 : index
    %c0_19 = arith.constant 0 : index
    %52 = vector.load %arg7[%c0_18, %c0_19] : memref<1x128xf32, #tpu.memory_space<vmem>>, vector<1x128xf32>
    tpu.vector_store %arg7[%c0_18, %c0_19], %51 {strides = array<i32>} : memref<1x128xf32, #tpu.memory_space<vmem>>, vector<1x128xf32>,
    return
  }
  func.func @transform_0(%arg0: i32) -> (i32, i32) {
    %c0_i32 = arith.constant 0 : i32
    %c0_i32_0 = arith.constant 0 : i32
    return %c0_i32, %arg0 : i32, i32
  }
  func.func @transform_1(%arg0: i32) -> (i32, i32) {
    %c0_i32 = arith.constant 0 : i32
    %c0_i32_0 = arith.constant 0 : i32
    %c0_i32_1 = arith.constant 0 : i32
    return %c0_i32, %c0_i32_0 : i32, i32
  }
  func.func @transform_2(%arg0: i32) -> (i32, i32) {
    %c0_i32 = arith.constant 0 : i32
    %c0_i32_0 = arith.constant 0 : i32
    %c0_i32_1 = arith.constant 0 : i32
    return %c0_i32, %c0_i32_0 : i32, i32
  }
  func.func @transform_3(%arg0: i32) -> (i32, i32, i32) {
    %c0_i32 = arith.constant 0 : i32
    %c0_i32_0 = arith.constant 0 : i32
    %c0_i32_1 = arith.constant 0 : i32
    %c0_i32_2 = arith.constant 0 : i32
    return %c0_i32, %c0_i32_0, %c0_i32_1 : i32, i32, i32
  }
  func.func @transform_4(%arg0: i32) -> (i32, i32) {
    %c0_i32 = arith.constant 0 : i32
    %c0_i32_0 = arith.constant 0 : i32
    %c0_i32_1 = arith.constant 0 : i32
    return %c0_i32, %c0_i32_0 : i32, i32
  }
  func.func @transform_5(%arg0: i32) -> (i32, i32) {
    %c0_i32 = arith.constant 0 : i32
    %c0_i32_0 = arith.constant 0 : i32
    %c0_i32_1 = arith.constant 0 : i32
    return %c0_i32, %c0_i32_0 : i32, i32
  }
  func.func @transform_6(%arg0: i32) -> (i32, i32) {
    %c0_i32 = arith.constant 0 : i32
    %c0_i32_0 = arith.constant 0 : i32
    return %c0_i32, %arg0 : i32, i32
  }
}

</mosaic_0001>

<llo_original>
// kernel: tpu_custom_call.1
$region0: #{tpu_custom_call.1}
  #allocation0 [shape = 'u32[]', space=smem, size = 0x4, offset = 0x4, fixed_abs, tag = 'smem constant byte address 0x4 - core index']
  #allocation1 [shape = 'u32[144,128]{1,0:T(1,128)}', space=vmem, size = 0x12000, scoped, tag = 'internal scratch']
  %s0 = inlined_call_operand.vmem [shape: f32[5,128], index: 0, kind: input, shape index: {}]
  %s1 = inlined_call_operand.vmem [shape: f32[32,9], index: 1, kind: input, shape index: {}]
  %s2 = inlined_call_operand.vmem [shape: f32[49,32], index: 2, kind: input, shape index: {}]
  %s3 = inlined_call_operand.vmem [shape: f32[2,32,32], index: 3, kind: input, shape index: {}]
  %s4 = inlined_call_operand.vmem [shape: f32[32,3], index: 4, kind: input, shape index: {}]
  %s5 = inlined_call_operand.vmem [shape: f32[1,40], index: 5, kind: input, shape index: {}]
  %s6 = inlined_call_operand.hbm [shape: f32[1,128], index: 6, kind: output, shape index: {}]
  %s7 = sld [smem:[#allocation0]]
  $region34: #{tpu_custom_call.1} parent=0
    _
  %s9 = ssub.s32 1, %s7
  %s10 = scalar_select 0, %s9, %s7
  $region1: #{tpu_custom_call.1} parent=0
    #allocation2 [shape = 'u8[512]{0}', space=vmem, size = 0x400, scoped, tag = 'output window, operand 0, single buffered']
    #allocation3 [shape = 's32[1]{0}', space=sflag, size = 0x4, scoped, tag = 'scoped memory for tpu_custom_call.1']
    %11 = vsyncpa [#allocation3], 0
    // Predicated region
    $region2: #{tpu_custom_call.1} parent=1 // pred_check
      _
    $region3: #{tpu_custom_call.1} parent=1 // pred_check_branch
      %13 = sbr.rel (0) target = $region5
    $region4: #{tpu_custom_call.1} parent=1 // pred_region
      _
    $region5: #{tpu_custom_call.1} parent=1 // pred_fallthru
      _
    // Predicated region
    $region6: #{tpu_custom_call.1} parent=1 // pred_check
      _
    $region7: #{tpu_custom_call.1} parent=1 // pred_check_branch
      %15 = sbr.rel (0) target = $region9
    $region8: #{tpu_custom_call.1} parent=1 // pred_region
      _
    $region9: #{tpu_custom_call.1} parent=1 // pred_fallthru
      _
    // Predicated region
    $region10: #{tpu_custom_call.1} parent=1 // pred_check
      _
    $region11: #{tpu_custom_call.1} parent=1 // pred_check_branch
      %17 = sbr.rel (0) target = $region13
    $region12: #{tpu_custom_call.1} parent=1 // pred_region
      _
    $region13: #{tpu_custom_call.1} parent=1 // pred_fallthru
      _
    // Predicated region
    $region14: #{tpu_custom_call.1} parent=1 // pred_check
      _
    $region15: #{tpu_custom_call.1} parent=1 // pred_check_branch
      %19 = sbr.rel (0) target = $region17
    $region16: #{tpu_custom_call.1} parent=1 // pred_region
      _
    $region17: #{tpu_custom_call.1} parent=1 // pred_fallthru
      _
    // Predicated region
    $region18: #{tpu_custom_call.1} parent=1 // pred_check
      _
    $region19: #{tpu_custom_call.1} parent=1 // pred_check_branch
      %21 = sbr.rel (0) target = $region21
    $region20: #{tpu_custom_call.1} parent=1 // pred_region
      _
    $region21: #{tpu_custom_call.1} parent=1 // pred_fallthru
      _
    // Predicated region
    $region22: #{tpu_custom_call.1} parent=1 // pred_check
      _
    $region23: #{tpu_custom_call.1} parent=1 // pred_check_branch
      %23 = sbr.rel (0) target = $region25
    $region24: #{tpu_custom_call.1} parent=1 // pred_region
      _
    $region25: #{tpu_custom_call.1} parent=1 // pred_fallthru
      _
    %v24 = vld [vmem:[%s0] sm:$0x1f]
    %v25 = vld [vmem:[%s1] sm:$0xff]
    %v26 = vld [vmem:[%s1 + $0x8] sm:$0xff]
    %v27 = vld [vmem:[%s1 + $0x10] sm:$0xff]
    %v28 = vld [vmem:[%s1 + $0x18] sm:$0xff]
    %vm29 = vcmask 39936
    %v31 = vsel %vm29, %v25, 0
    %v34 = vsel %vm29, %v26, 0
    %v37 = vsel %vm29, %v27, 0
    %v40 = vsel %vm29, %v28, 0
    %vm42 = vcmask 1044480
    %v44 = vsel %vm42, %v24, 0
    %46 = vmatprep.subr.mxu0 0.0
    %47 = vmatpush1.msra.mxu0 %v44
    %48 = vmatprep.subr.mxu0 0.0
    %49 = vmatpush1.msra.mxu0 0.0
    %50 = vmatprep.subr.mxu0 0.0
    %51 = vmatpush1.msra.mxu0 0.0
    %52 = vmatprep.subr.mxu0 0.0
    %53 = vmatpush1.msra.mxu0 0.0
    %54 = vmatprep.subr.mxu0 0.0
    %55 = vmatpush1.msra.mxu0 0.0
    %56 = vmatprep.subr.mxu0 0.0
    %57 = vmatpush1.msra.mxu0 0.0
    %58 = vmatprep.subr.mxu0 0.0
    %59 = vmatpush1.msra.mxu0 0.0
    %60 = vmatprep.subr.mxu0 0.0
    %61 = vmatpush1.msra.mxu0 0.0
    %62 = vmatprep.subr.mxu0 0.0
    %63 = vmatpush1.msra.mxu0 0.0
    %64 = vmatprep.subr.mxu0 0.0
    %65 = vmatpush1.msra.mxu0 0.0
    %66 = vmatprep.subr.mxu0 0.0
    %67 = vmatpush1.msra.mxu0 0.0
    %68 = vmatprep.subr.mxu0 0.0
    %69 = vmatpush1.msra.mxu0 0.0
    %70 = vmatprep.subr.mxu0 0.0
    %71 = vmatpush1.msra.mxu0 0.0
    %72 = vmatprep.subr.mxu0 0.0
    %73 = vmatpush1.msra.mxu0 0.0
    %74 = vmatprep.subr.mxu0 0.0
    %75 = vmatpush1.msra.mxu0 0.0
    %76 = vmatprep.subr.mxu0 0.0
    %77 = vmatpush1.msra.mxu0 0.0
    %78 = vmatprep.subr.mxu0 0.0
    %79 = vmatpush1.msra.mxu0 0.0
    %80 = vmatprep.subr.mxu0 0.0
    %81 = vmatpush1.msra.mxu0 0.0
    %82 = vmatprep.subr.mxu0 0.0
    %83 = vmatpush1.msra.mxu0 0.0
    %84 = vmatprep.subr.mxu0 0.0
    %85 = vmatpush1.msra.mxu0 0.0
    %86 = vmatprep.subr.mxu0 0.0
    %87 = vmatpush1.msra.mxu0 0.0
    %88 = vmatprep.subr.mxu0 0.0
    %89 = vmatpush1.msra.mxu0 0.0
    %90 = vmatprep.subr.mxu0 0.0
    %91 = vmatpush1.msra.mxu0 0.0
    %92 = vmatprep.subr.mxu0 0.0
    %93 = vmatpush1.msra.mxu0 0.0
    %94 = vmatprep.subr.mxu0 0.0
    %95 = vmatpush1.msra.mxu0 0.0
    %96 = vmatprep.subr.mxu0 0.0
    %97 = vmatpush1.msra.mxu0 0.0
    %98 = vmatprep.subr.mxu0 0.0
    %99 = vmatpush1.msra.mxu0 0.0
    %100 = vmatprep.subr.mxu0 0.0
    %101 = vmatpush1.msra.mxu0 0.0
    %102 = vmatprep.subr.mxu0 0.0
    %103 = vmatpush1.msra.mxu0 0.0
    %104 = vmatprep.subr.mxu0 0.0
    %105 = vmatpush1.msra.mxu0 0.0
    %106 = vmatprep.subr.mxu0 0.0
    %107 = vmatpush1.msra.mxu0 0.0
    %108 = vmatprep.subr.mxu0 0.0
    %109 = vmatpush1.msra.mxu0 0.0
    %110 = vmatprep.mubr.f32.mxu0 0.0
    %111 = vmatmul.mubr.f32.gmra.mrb[0].mxu0 %v31
    %v112 = vpop.f32.mrb[0].mxu0
    %v113 = vadd.f32 0.0, %v112
    %v114 = vpop.f32.mrb[0].mxu0
    %115 = vmatprep.mubr.f32.mxu0 0.0
    %116 = vmatmul.mubr.f32.gmra.mrb[0].mxu0 %v34
    %v117 = vpop.f32.mrb[0].mxu0
    %v118 = vadd.f32 0.0, %v117
    %v119 = vpop.f32.mrb[0].mxu0
    %120 = vmatprep.mubr.f32.mxu0 0.0
    %121 = vmatmul.mubr.f32.gmra.mrb[0].mxu0 %v37
    %v122 = vpop.f32.mrb[0].mxu0
    %v123 = vadd.f32 0.0, %v122
    %v124 = vpop.f32.mrb[0].mxu0
    %125 = vmatprep.mubr.f32.mxu0 0.0
    %126 = vmatmul.mubr.f32.gmra.mrb[0].mxu0 %v40
    %v127 = vpop.f32.mrb[0].mxu0
    %v128 = vadd.f32 0.0, %v127
    %v129 = vpop.f32.mrb[0].mxu0
    %130 = vdwg.mxu0
    %131 = vset.pattern.permute.xlu0 5
    %132 = vperm.xlu0 %131, %v25
    %v133 = vpop.permute.xlu0 %132
    %135 = vset.pattern.permute.xlu0 5
    %136 = vperm.xlu0 %135, %v26
    %v137 = vpop.permute.xlu0 %136
    %139 = vset.pattern.permute.xlu0 5
    %140 = vperm.xlu0 %139, %v27
    %v141 = vpop.permute.xlu0 %140
    %143 = vset.pattern.permute.xlu0 5
    %144 = vperm.xlu0 %143, %v28
    %v145 = vpop.permute.xlu0 %144
    %vm147 = vcmp.eq.f32.partialorder %v113, %v133
    %vm148 = vcmp.eq.f32.partialorder %v118, %v137
    %vm149 = vcmp.eq.f32.partialorder %v123, %v141
    %vm150 = vcmp.eq.f32.partialorder %v128, %v145
    %v151 = vsel %vm147, 1, 0
    %v152 = vsel %vm148, 1, 0
    %v153 = vsel %vm149, 1, 0
    %v154 = vsel %vm150, 1, 0
    %v155 = vcvt.s32.f32 %v151
    %v156 = vcvt.s32.f32 %v152
    %v157 = vcvt.s32.f32 %v153
    %v158 = vcvt.s32.f32 %v154
    %v159 = vmul.f32 %v113, %v113
    %v160 = vmul.f32 %v118, %v118
    %v161 = vmul.f32 %v123, %v123
    %v162 = vmul.f32 %v128, %v128
    %163 = vset.pattern.permute.xlu0 6
    %164 = vperm.xlu0 %163, %v25
    %v165 = vpop.permute.xlu0 %164
    %167 = vset.pattern.permute.xlu0 6
    %168 = vperm.xlu0 %167, %v26
    %v169 = vpop.permute.xlu0 %168
    %171 = vset.pattern.permute.xlu0 6
    %172 = vperm.xlu0 %171, %v27
    %v173 = vpop.permute.xlu0 %172
    %175 = vset.pattern.permute.xlu0 6
    %176 = vperm.xlu0 %175, %v28
    %v177 = vpop.permute.xlu0 %176
    %v179 = vmul.f32 %v165, %v159
    %v180 = vmul.f32 %v169, %v160
    %v181 = vmul.f32 %v173, %v161
    %v182 = vmul.f32 %v177, %v162
    %183 = vset.pattern.permute.xlu0 7
    %184 = vperm.xlu0 %183, %v25
    %v185 = vpop.permute.xlu0 %184
    %187 = vset.pattern.permute.xlu0 7
    %188 = vperm.xlu0 %187, %v26
    %v189 = vpop.permute.xlu0 %188
    %191 = vset.pattern.permute.xlu0 7
    %192 = vperm.xlu0 %191, %v27
    %v193 = vpop.permute.xlu0 %192
    %195 = vset.pattern.permute.xlu0 7
    %196 = vperm.xlu0 %195, %v28
    %v197 = vpop.permute.xlu0 %196
    %v199 = vmul.f32 %v185, %v113
    %v200 = vmul.f32 %v189, %v118
    %v201 = vmul.f32 %v193, %v123
    %v202 = vmul.f32 %v197, %v128
    %v203 = vadd.f32 %v179, %v199
    %v204 = vadd.f32 %v180, %v200
    %v205 = vadd.f32 %v181, %v201
    %v206 = vadd.f32 %v182, %v202
    %207 = vset.pattern.permute.xlu0 8
    %208 = vperm.xlu0 %207, %v25
    %v209 = vpop.permute.xlu0 %208
    %211 = vset.pattern.permute.xlu0 8
    %212 = vperm.xlu0 %211, %v26
    %v213 = vpop.permute.xlu0 %212
    %215 = vset.pattern.permute.xlu0 8
    %216 = vperm.xlu0 %215, %v27
    %v217 = vpop.permute.xlu0 %216
    %219 = vset.pattern.permute.xlu0 8
    %220 = vperm.xlu0 %219, %v28
    %v221 = vpop.permute.xlu0 %220
    %v223 = vmul.f32 %v209, %v155
    %v224 = vmul.f32 %v213, %v156
    %v225 = vmul.f32 %v217, %v157
    %v226 = vmul.f32 %v221, %v158
    %v227 = vadd.f32 %v203, %v223
    %v228 = vadd.f32 %v204, %v224
    %v229 = vadd.f32 %v205, %v225
    %v230 = vadd.f32 %v206, %v226
    %v231 = vld [vmem:[%s2] sm:$0xff]
    %v232 = vld [vmem:[%s2 + $0x8] sm:$0xff]
    %v233 = vld [vmem:[%s2 + $0x10] sm:$0xff]
    %v234 = vld [vmem:[%s2 + $0x18] sm:$0xff]
    %v235 = vld [vmem:[%s2 + $0x20] sm:$0xff]
    %v236 = vld [vmem:[%s2 + $0x28] sm:$0xff]
    %v237 = vld [vmem:[%s2 + $0x30] sm:$0x1]
    %vm238 = vcmask 261120
    %v240 = vsel %vm238, %v231, 0
    %v243 = vsel %vm238, %v232, 0
    %v246 = vsel %vm238, %v233, 0
    %v249 = vsel %vm238, %v234, 0
    %v252 = vsel %vm238, %v235, 0
    %v255 = vsel %vm238, %v236, 0
    %v258 = vsel %vm238, %v237, 0
    %260 = vmatprep.subr.mxu0 0.0
    %261 = vmatpush1.msra.mxu0 %v227
    %262 = vmatprep.subr.mxu0 0.0
    %263 = vmatpush1.msra.mxu0 %v228
    %264 = vmatprep.subr.mxu0 0.0
    %265 = vmatpush1.msra.mxu0 %v229
    %266 = vmatprep.subr.mxu0 0.0
    %267 = vmatpush1.msra.mxu0 %v230
    %268 = vmatprep.subr.mxu0 0.0
    %269 = vmatpush1.msra.mxu0 0.0
    %270 = vmatprep.subr.mxu0 0.0
    %271 = vmatpush1.msra.mxu0 0.0
    %272 = vmatprep.subr.mxu0 0.0
    %273 = vmatpush1.msra.mxu0 0.0
    %274 = vmatprep.subr.mxu0 0.0
    %275 = vmatpush1.msra.mxu0 0.0
    %276 = vmatprep.subr.mxu0 0.0
    %277 = vmatpush1.msra.mxu0 0.0
    %278 = vmatprep.subr.mxu0 0.0
    %279 = vmatpush1.msra.mxu0 0.0
    %280 = vmatprep.subr.mxu0 0.0
    %281 = vmatpush1.msra.mxu0 0.0
    %282 = vmatprep.subr.mxu0 0.0
    %283 = vmatpush1.msra.mxu0 0.0
    %284 = vmatprep.subr.mxu0 0.0
    %285 = vmatpush1.msra.mxu0 0.0
    %286 = vmatprep.subr.mxu0 0.0
    %287 = vmatpush1.msra.mxu0 0.0
    %288 = vmatprep.subr.mxu0 0.0
    %289 = vmatpush1.msra.mxu0 0.0
    %290 = vmatprep.subr.mxu0 0.0
    %291 = vmatpush1.msra.mxu0 0.0
    %292 = vmatprep.subr.mxu0 0.0
    %293 = vmatpush1.msra.mxu0 0.0
    %294 = vmatprep.subr.mxu0 0.0
    %295 = vmatpush1.msra.mxu0 0.0
    %296 = vmatprep.subr.mxu0 0.0
    %297 = vmatpush1.msra.mxu0 0.0
    %298 = vmatprep.subr.mxu0 0.0
    %299 = vmatpush1.msra.mxu0 0.0
    %300 = vmatprep.subr.mxu0 0.0
    %301 = vmatpush1.msra.mxu0 0.0
    %302 = vmatprep.subr.mxu0 0.0
    %303 = vmatpush1.msra.mxu0 0.0
    %304 = vmatprep.subr.mxu0 0.0
    %305 = vmatpush1.msra.mxu0 0.0
    %306 = vmatprep.subr.mxu0 0.0
    %307 = vmatpush1.msra.mxu0 0.0
    %308 = vmatprep.subr.mxu0 0.0
    %309 = vmatpush1.msra.mxu0 0.0
    %310 = vmatprep.subr.mxu0 0.0
    %311 = vmatpush1.msra.mxu0 0.0
    %312 = vmatprep.subr.mxu0 0.0
    %313 = vmatpush1.msra.mxu0 0.0
    %314 = vmatprep.subr.mxu0 0.0
    %315 = vmatpush1.msra.mxu0 0.0
    %316 = vmatprep.subr.mxu0 0.0
    %317 = vmatpush1.msra.mxu0 0.0
    %318 = vmatprep.subr.mxu0 0.0
    %319 = vmatpush1.msra.mxu0 0.0
    %320 = vmatprep.subr.mxu0 0.0
    %321 = vmatpush1.msra.mxu0 0.0
    %322 = vmatprep.subr.mxu0 0.0
    %323 = vmatpush1.msra.mxu0 0.0
    %324 = vmatprep.mubr.f32.mxu0 0.0
    %325 = vmatmul.mubr.f32.gmra.mrb[0].mxu0 %v240
    %v326 = vpop.f32.mrb[0].mxu0
    %v327 = vadd.f32 0.0, %v326
    %v328 = vpop.f32.mrb[0].mxu0
    %329 = vmatprep.mubr.f32.mxu0 0.0
    %330 = vmatmul.mubr.f32.gmra.mrb[0].mxu0 %v243
    %v331 = vpop.f32.mrb[0].mxu0
    %v332 = vadd.f32 0.0, %v331
    %v333 = vpop.f32.mrb[0].mxu0
    %334 = vmatprep.mubr.f32.mxu0 0.0
    %335 = vmatmul.mubr.f32.gmra.mrb[0].mxu0 %v246
    %v336 = vpop.f32.mrb[0].mxu0
    %v337 = vadd.f32 0.0, %v336
    %v338 = vpop.f32.mrb[0].mxu0
    %339 = vmatprep.mubr.f32.mxu0 0.0
    %340 = vmatmul.mubr.f32.gmra.mrb[0].mxu0 %v249
    %v341 = vpop.f32.mrb[0].mxu0
    %v342 = vadd.f32 0.0, %v341
    %v343 = vpop.f32.mrb[0].mxu0
    %344 = vmatprep.mubr.f32.mxu0 0.0
    %345 = vmatmul.mubr.f32.gmra.mrb[0].mxu0 %v252
    %v346 = vpop.f32.mrb[0].mxu0
    %v347 = vadd.f32 0.0, %v346
    %v348 = vpop.f32.mrb[0].mxu0
    %349 = vmatprep.mubr.f32.mxu0 0.0
    %350 = vmatmul.mubr.f32.gmra.mrb[0].mxu0 %v255
    %v351 = vpop.f32.mrb[0].mxu0
    %v352 = vadd.f32 0.0, %v351
    %v353 = vpop.f32.mrb[0].mxu0
    %354 = vmatprep.mubr.f32.mxu0 0.0
    %355 = vmatmul.mubr.f32.gmra.mrb[0].mxu0 %v258
    %v356 = vpop.f32.mrb[0].mxu0
    %v357 = vadd.f32 0.0, %v356
    %v358 = vpop.f32.mrb[0].mxu0
    %359 = vdwg.mxu0
    %v360 = vld [vmem:[%s4] sm:$0xff]
    %v361 = vld [vmem:[%s4 + $0x8] sm:$0xff]
    %v362 = vld [vmem:[%s4 + $0x10] sm:$0xff]
    %v363 = vld [vmem:[%s4 + $0x18] sm:$0xff]
    %365 = vset.pattern.permute.xlu0 0
    %366 = vperm.xlu0 %365, %v360
    %v367 = vpop.permute.xlu0 %366
    %370 = vset.pattern.permute.xlu0 0
    %371 = vperm.xlu0 %370, %v361
    %v372 = vpop.permute.xlu0 %371
    %375 = vset.pattern.permute.xlu0 0
    %376 = vperm.xlu0 %375, %v362
    %v377 = vpop.permute.xlu0 %376
    %380 = vset.pattern.permute.xlu0 0
    %381 = vperm.xlu0 %380, %v363
    %v382 = vpop.permute.xlu0 %381
    %v384 = vadd.f32 %v327, %v367
    %v385 = vadd.f32 %v332, %v372
    %v386 = vadd.f32 %v337, %v377
    %v387 = vadd.f32 %v342, %v382
    %v388 = vtanh.pop %v384
    %v389 = vtanh.pop %v385
    %v390 = vtanh.pop %v386
    %v391 = vtanh.pop %v387
    %v392 = vld [vmem:[%s3] sm:$0xff]
    %v393 = vld [vmem:[%s3 + $0x8] sm:$0xff]
    %v394 = vld [vmem:[%s3 + $0x10] sm:$0xff]
    %v395 = vld [vmem:[%s3 + $0x18] sm:$0xff]
    %396 = vset.pattern.permute.xlu0 1
    %397 = vperm.xlu0 %396, %v360
    %v398 = vpop.permute.xlu0 %397
    %400 = vset.pattern.permute.xlu0 1
    %401 = vperm.xlu0 %400, %v361
    %v402 = vpop.permute.xlu0 %401
    %404 = vset.pattern.permute.xlu0 1
    %405 = vperm.xlu0 %404, %v362
    %v406 = vpop.permute.xlu0 %405
    %408 = vset.pattern.permute.xlu0 1
    %409 = vperm.xlu0 %408, %v363
    %v410 = vpop.permute.xlu0 %409
    %v413 = vsel %vm238, %v392, 0
    %v416 = vsel %vm238, %v393, 0
    %v419 = vsel %vm238, %v394, 0
    %v422 = vsel %vm238, %v395, 0
    %424 = vmatprep.subr.mxu0 0.0
    %425 = vmatpush1.msra.mxu0 %v388
    %426 = vmatprep.subr.mxu0 0.0
    %427 = vmatpush1.msra.mxu0 %v389
    %428 = vmatprep.subr.mxu0 0.0
    %429 = vmatpush1.msra.mxu0 %v390
    %430 = vmatprep.subr.mxu0 0.0
    %431 = vmatpush1.msra.mxu0 %v391
    %432 = vmatprep.subr.mxu0 0.0
    %433 = vmatpush1.msra.mxu0 0.0
    %434 = vmatprep.subr.mxu0 0.0
    %435 = vmatpush1.msra.mxu0 0.0
    %436 = vmatprep.subr.mxu0 0.0
    %437 = vmatpush1.msra.mxu0 0.0
    %438 = vmatprep.subr.mxu0 0.0
    %439 = vmatpush1.msra.mxu0 0.0
    %440 = vmatprep.subr.mxu0 0.0
    %441 = vmatpush1.msra.mxu0 0.0
    %442 = vmatprep.subr.mxu0 0.0
    %443 = vmatpush1.msra.mxu0 0.0
    %444 = vmatprep.subr.mxu0 0.0
    %445 = vmatpush1.msra.mxu0 0.0
    %446 = vmatprep.subr.mxu0 0.0
    %447 = vmatpush1.msra.mxu0 0.0
    %448 = vmatprep.subr.mxu0 0.0
    %449 = vmatpush1.msra.mxu0 0.0
    %450 = vmatprep.subr.mxu0 0.0
    %451 = vmatpush1.msra.mxu0 0.0
    %452 = vmatprep.subr.mxu0 0.0
    %453 = vmatpush1.msra.mxu0 0.0
    %454 = vmatprep.subr.mxu0 0.0
    %455 = vmatpush1.msra.mxu0 0.0
    %456 = vmatprep.subr.mxu0 0.0
    %457 = vmatpush1.msra.mxu0 0.0
    %458 = vmatprep.subr.mxu0 0.0
    %459 = vmatpush1.msra.mxu0 0.0
    %460 = vmatprep.subr.mxu0 0.0
    %461 = vmatpush1.msra.mxu0 0.0
    %462 = vmatprep.subr.mxu0 0.0
    %463 = vmatpush1.msra.mxu0 0.0
    %464 = vmatprep.subr.mxu0 0.0
    %465 = vmatpush1.msra.mxu0 0.0
    %466 = vmatprep.subr.mxu0 0.0
    %467 = vmatpush1.msra.mxu0 0.0
    %468 = vmatprep.subr.mxu0 0.0
    %469 = vmatpush1.msra.mxu0 0.0
    %470 = vmatprep.subr.mxu0 0.0
    %471 = vmatpush1.msra.mxu0 0.0
    %472 = vmatprep.subr.mxu0 0.0
    %473 = vmatpush1.msra.mxu0 0.0
    %474 = vmatprep.subr.mxu0 0.0
    %475 = vmatpush1.msra.mxu0 0.0
    %476 = vmatprep.subr.mxu0 0.0
    %477 = vmatpush1.msra.mxu0 0.0
    %478 = vmatprep.subr.mxu0 0.0
    %479 = vmatpush1.msra.mxu0 0.0
    %480 = vmatprep.subr.mxu0 0.0
    %481 = vmatpush1.msra.mxu0 0.0
    %482 = vmatprep.subr.mxu0 0.0
    %483 = vmatpush1.msra.mxu0 0.0
    %484 = vmatprep.subr.mxu0 0.0
    %485 = vmatpush1.msra.mxu0 0.0
    %486 = vmatprep.subr.mxu0 0.0
    %487 = vmatpush1.msra.mxu0 0.0
    %488 = vmatprep.mubr.f32.mxu0 0.0
    %489 = vmatmul.mubr.f32.gmra.mrb[0].mxu0 %v413
    %v490 = vpop.f32.mrb[0].mxu0
    %v491 = vadd.f32 %v398, %v490
    %v492 = vpop.f32.mrb[0].mxu0
    %493 = vmatprep.mubr.f32.mxu0 0.0
    %494 = vmatmul.mubr.f32.gmra.mrb[0].mxu0 %v416
    %v495 = vpop.f32.mrb[0].mxu0
    %v496 = vadd.f32 %v402, %v495
    %v497 = vpop.f32.mrb[0].mxu0
    %498 = vmatprep.mubr.f32.mxu0 0.0
    %499 = vmatmul.mubr.f32.gmra.mrb[0].mxu0 %v419
    %v500 = vpop.f32.mrb[0].mxu0
    %v501 = vadd.f32 %v406, %v500
    %v502 = vpop.f32.mrb[0].mxu0
    %503 = vmatprep.mubr.f32.mxu0 0.0
    %504 = vmatmul.mubr.f32.gmra.mrb[0].mxu0 %v422
    %v505 = vpop.f32.mrb[0].mxu0
    %v506 = vadd.f32 %v410, %v505
    %v507 = vpop.f32.mrb[0].mxu0
    %508 = vdwg.mxu0
    %v509 = vtanh.pop %v491
    %v510 = vtanh.pop %v496
    %v511 = vtanh.pop %v501
    %v512 = vtanh.pop %v506
    %s513 = scalar_lea.vmem %s3, 32
    %v514 = vld [vmem:[%s513] sm:$0xff]
    %v515 = vld [vmem:[%s513 + $0x8] sm:$0xff]
    %v516 = vld [vmem:[%s513 + $0x10] sm:$0xff]
    %v517 = vld [vmem:[%s513 + $0x18] sm:$0xff]
    %518 = vset.pattern.permute.xlu0 2
    %519 = vperm.xlu0 %518, %v360
    %v520 = vpop.permute.xlu0 %519
    %522 = vset.pattern.permute.xlu0 2
    %523 = vperm.xlu0 %522, %v361
    %v524 = vpop.permute.xlu0 %523
    %526 = vset.pattern.permute.xlu0 2
    %527 = vperm.xlu0 %526, %v362
    %v528 = vpop.permute.xlu0 %527
    %530 = vset.pattern.permute.xlu0 2
    %531 = vperm.xlu0 %530, %v363
    %v532 = vpop.permute.xlu0 %531
    %v535 = vsel %vm238, %v514, 0
    %v538 = vsel %vm238, %v515, 0
    %v541 = vsel %vm238, %v516, 0
    %v544 = vsel %vm238, %v517, 0
    %546 = vmatprep.subr.mxu0 0.0
    %547 = vmatpush1.msra.mxu0 %v509
    %548 = vmatprep.subr.mxu0 0.0
    %549 = vmatpush1.msra.mxu0 %v510
    %550 = vmatprep.subr.mxu0 0.0
    %551 = vmatpush1.msra.mxu0 %v511
    %552 = vmatprep.subr.mxu0 0.0
    %553 = vmatpush1.msra.mxu0 %v512
    %554 = vmatprep.subr.mxu0 0.0
    %555 = vmatpush1.msra.mxu0 0.0
    %556 = vmatprep.subr.mxu0 0.0
    %557 = vmatpush1.msra.mxu0 0.0
    %558 = vmatprep.subr.mxu0 0.0
    %559 = vmatpush1.msra.mxu0 0.0
    %560 = vmatprep.subr.mxu0 0.0
    %561 = vmatpush1.msra.mxu0 0.0
    %562 = vmatprep.subr.mxu0 0.0
    %563 = vmatpush1.msra.mxu0 0.0
    %564 = vmatprep.subr.mxu0 0.0
    %565 = vmatpush1.msra.mxu0 0.0
    %566 = vmatprep.subr.mxu0 0.0
    %567 = vmatpush1.msra.mxu0 0.0
    %568 = vmatprep.subr.mxu0 0.0
    %569 = vmatpush1.msra.mxu0 0.0
    %570 = vmatprep.subr.mxu0 0.0
    %571 = vmatpush1.msra.mxu0 0.0
    %572 = vmatprep.subr.mxu0 0.0
    %573 = vmatpush1.msra.mxu0 0.0
    %574 = vmatprep.subr.mxu0 0.0
    %575 = vmatpush1.msra.mxu0 0.0
    %576 = vmatprep.subr.mxu0 0.0
    %577 = vmatpush1.msra.mxu0 0.0
    %578 = vmatprep.subr.mxu0 0.0
    %579 = vmatpush1.msra.mxu0 0.0
    %580 = vmatprep.subr.mxu0 0.0
    %581 = vmatpush1.msra.mxu0 0.0
    %582 = vmatprep.subr.mxu0 0.0
    %583 = vmatpush1.msra.mxu0 0.0
    %584 = vmatprep.subr.mxu0 0.0
    %585 = vmatpush1.msra.mxu0 0.0
    %586 = vmatprep.subr.mxu0 0.0
    %587 = vmatpush1.msra.mxu0 0.0
    %588 = vmatprep.subr.mxu0 0.0
    %589 = vmatpush1.msra.mxu0 0.0
    %590 = vmatprep.subr.mxu0 0.0
    %591 = vmatpush1.msra.mxu0 0.0
    %592 = vmatprep.subr.mxu0 0.0
    %593 = vmatpush1.msra.mxu0 0.0
    %594 = vmatprep.subr.mxu0 0.0
    %595 = vmatpush1.msra.mxu0 0.0
    %596 = vmatprep.subr.mxu0 0.0
    %597 = vmatpush1.msra.mxu0 0.0
    %598 = vmatprep.subr.mxu0 0.0
    %599 = vmatpush1.msra.mxu0 0.0
    %600 = vmatprep.subr.mxu0 0.0
    %601 = vmatpush1.msra.mxu0 0.0
    %602 = vmatprep.subr.mxu0 0.0
    %603 = vmatpush1.msra.mxu0 0.0
    %604 = vmatprep.subr.mxu0 0.0
    %605 = vmatpush1.msra.mxu0 0.0
    %606 = vmatprep.subr.mxu0 0.0
    %607 = vmatpush1.msra.mxu0 0.0
    %608 = vmatprep.subr.mxu0 0.0
    %609 = vmatpush1.msra.mxu0 0.0
    %610 = vmatprep.mubr.f32.mxu0 0.0
    %611 = vmatmul.mubr.f32.gmra.mrb[0].mxu0 %v535
    %v612 = vpop.f32.mrb[0].mxu0
    %v613 = vadd.f32 %v520, %v612
    %v614 = vpop.f32.mrb[0].mxu0
    %615 = vmatprep.mubr.f32.mxu0 0.0
    %616 = vmatmul.mubr.f32.gmra.mrb[0].mxu0 %v538
    %v617 = vpop.f32.mrb[0].mxu0
    %v618 = vadd.f32 %v524, %v617
    %v619 = vpop.f32.mrb[0].mxu0
    %620 = vmatprep.mubr.f32.mxu0 0.0
    %621 = vmatmul.mubr.f32.gmra.mrb[0].mxu0 %v541
    %v622 = vpop.f32.mrb[0].mxu0
    %v623 = vadd.f32 %v528, %v622
    %v624 = vpop.f32.mrb[0].mxu0
    %625 = vmatprep.mubr.f32.mxu0 0.0
    %626 = vmatmul.mubr.f32.gmra.mrb[0].mxu0 %v544
    %v627 = vpop.f32.mrb[0].mxu0
    %v628 = vadd.f32 %v532, %v627
    %v629 = vpop.f32.mrb[0].mxu0
    %630 = vdwg.mxu0
    %v631 = vtanh.pop %v613
    %v632 = vtanh.pop %v618
    %v633 = vtanh.pop %v623
    %v634 = vtanh.pop %v628
    %v635 = vmul.f32 %v347, %v347
    %v636 = vsub.f32 %v635, %v352
    %v637 = vld [vmem:[%s5] sm:$0x1]
    %vm638 = vcmask 326656
    %v640 = vsel %vm638, %v637, 0
    %642 = vmatprep.subr.mxu0 0.0
    %643 = vmatpush1.msra.mxu0 %v636
    %644 = vmatprep.subr.mxu0 0.0
    %645 = vmatpush1.msra.mxu0 %v631
    %646 = vmatprep.subr.mxu0 0.0
    %647 = vmatpush1.msra.mxu0 %v632
    %648 = vmatprep.subr.mxu0 0.0
    %649 = vmatpush1.msra.mxu0 %v633
    %650 = vmatprep.subr.mxu0 0.0
    %651 = vmatpush1.msra.mxu0 %v634
    %652 = vmatprep.subr.mxu0 0.0
    %653 = vmatpush1.msra.mxu0 0.0
    %654 = vmatprep.subr.mxu0 0.0
    %655 = vmatpush1.msra.mxu0 0.0
    %656 = vmatprep.subr.mxu0 0.0
    %657 = vmatpush1.msra.mxu0 0.0
    %658 = vmatprep.subr.mxu0 0.0
    %659 = vmatpush1.msra.mxu0 0.0
    %660 = vmatprep.subr.mxu0 0.0
    %661 = vmatpush1.msra.mxu0 0.0
    %662 = vmatprep.subr.mxu0 0.0
    %663 = vmatpush1.msra.mxu0 0.0
    %664 = vmatprep.subr.mxu0 0.0
    %665 = vmatpush1.msra.mxu0 0.0
    %666 = vmatprep.subr.mxu0 0.0
    %667 = vmatpush1.msra.mxu0 0.0
    %668 = vmatprep.subr.mxu0 0.0
    %669 = vmatpush1.msra.mxu0 0.0
    %670 = vmatprep.subr.mxu0 0.0
    %671 = vmatpush1.msra.mxu0 0.0
    %672 = vmatprep.subr.mxu0 0.0
    %673 = vmatpush1.msra.mxu0 0.0
    %674 = vmatprep.subr.mxu0 0.0
    %675 = vmatpush1.msra.mxu0 0.0
    %676 = vmatprep.subr.mxu0 0.0
    %677 = vmatpush1.msra.mxu0 0.0
    %678 = vmatprep.subr.mxu0 0.0
    %679 = vmatpush1.msra.mxu0 0.0
    %680 = vmatprep.subr.mxu0 0.0
    %681 = vmatpush1.msra.mxu0 0.0
    %682 = vmatprep.subr.mxu0 0.0
    %683 = vmatpush1.msra.mxu0 0.0
    %684 = vmatprep.subr.mxu0 0.0
    %685 = vmatpush1.msra.mxu0 0.0
    %686 = vmatprep.subr.mxu0 0.0
    %687 = vmatpush1.msra.mxu0 0.0
    %688 = vmatprep.subr.mxu0 0.0
    %689 = vmatpush1.msra.mxu0 0.0
    %690 = vmatprep.subr.mxu0 0.0
    %691 = vmatpush1.msra.mxu0 0.0
    %692 = vmatprep.subr.mxu0 0.0
    %693 = vmatpush1.msra.mxu0 0.0
    %694 = vmatprep.subr.mxu0 0.0
    %695 = vmatpush1.msra.mxu0 0.0
    %696 = vmatprep.subr.mxu0 0.0
    %697 = vmatpush1.msra.mxu0 0.0
    %698 = vmatprep.subr.mxu0 0.0
    %699 = vmatpush1.msra.mxu0 0.0
    %700 = vmatprep.subr.mxu0 0.0
    %701 = vmatpush1.msra.mxu0 0.0
    %702 = vmatprep.subr.mxu0 0.0
    %703 = vmatpush1.msra.mxu0 0.0
    %704 = vmatprep.subr.mxu0 0.0
    %705 = vmatpush1.msra.mxu0 0.0
    %706 = vmatprep.mubr.f32.mxu0 0.0
    %707 = vmatmul.mubr.f32.gmra.mrb[0].mxu0 %v640
    %v708 = vpop.f32.mrb[0].mxu0
    %v709 = vadd.f32 0.0, %v708
    %v710 = vpop.f32.mrb[0].mxu0
    %711 = vdwg.mxu0
    %v712 = vadd.f32 %v357, %v709
    %713 = vst [vmem:[#allocation2] sm:$0x1] %v712
    // Predicated region
    $region26: #{tpu_custom_call.1} parent=1 // pred_check
      _
    $region27: #{tpu_custom_call.1} parent=1 // pred_check_branch
      %715 = sbr.rel (0) target = $region29
    $region28: #{tpu_custom_call.1} parent=1 // pred_region
      %s717 = ssub.s32 16, 16
      %718 = vsyncadd [#allocation3], %s717
      %s720 = sshll.u32 [#allocation2], 4
      %s721 = int_to_ptr.vmem [resolvable:$true] %s720
      %723 = dma.vmem_to_hbm [thread:$0]  %s721, 16, %s6, [#allocation3]
    $region29: #{tpu_custom_call.1} parent=1 // pred_fallthru
      _
    // Predicated region
    $region30: #{tpu_custom_call.1} parent=1 // pred_check
      _
    $region31: #{tpu_custom_call.1} parent=1 // pred_check_branch
      %725 = sbr.rel (0) target = $region33
    $region32: #{tpu_custom_call.1} parent=1 // pred_region
      %726 = dma.done [#allocation3], 16
    $region33: #{tpu_custom_call.1} parent=1 // pred_fallthru
      _
    %727 = vsyncpa [#allocation3], 1

</llo_original>
